<compile_context>
chip_gen: v6e
topology: v6e:2x2x1
jax: 0.10.0
libtpu: 0.0.40
codegen_flags: <defaults>
</compile_context>

<pallas_src>
import functools

import jax
import jax.numpy as jnp
from jax.experimental import pallas as pl
from jax.experimental.pallas import tpu as pltpu


# ---------------------------------------------------------------------------
# Kernel
# ---------------------------------------------------------------------------
def _pcn_fused_kernel(x_ref, wemb_ref, bemb_ref,
                      w1_ref, b1_ref, w2_ref, b2_ref,
                      out_ref, *, hidden_dim):
    """Fused PCN forward on one (batch-tile, features) block.

    x_ref    : [TB, S + R + 1]   concat(state, desired_return, desired_horizon)
    wemb_ref : [S + R + 1, 2H]   block-diag [[Ws, 0], [0, diag(scale) @ Wc]]
    bemb_ref : [1, 2H]           concat(bs, bc)
    w1/b1    : [H, H] / [1, H]
    w2/b2    : [H, A] / [1, A]
    out_ref  : [TB, A]           log-probabilities
    """
    f32 = jnp.float32

    # Single MXU pass for both embeddings, then sigmoid on the VPU/EUP.
    emb = jax.nn.sigmoid(
        jnp.dot(x_ref[...], wemb_ref[...], preferred_element_type=f32)
        + bemb_ref[...])                               # [TB, 2H]

    s = emb[:, :hidden_dim]                            # sigmoid(state @ Ws + bs)
    ce = emb[:, hidden_dim:]                           # sigmoid(c @ Wc + bc)
    h = s * ce                                         # [TB, H]

    # fc layer 1: ReLU
    h1 = jnp.maximum(
        jnp.dot(h, w1_ref[...], preferred_element_type=f32) + b1_ref[...],
        0.0)                                           # [TB, H]

    # fc layer 2 -> logits
    logits = (jnp.dot(h1, w2_ref[...], preferred_element_type=f32)
              + b2_ref[...])                           # [TB, A]

    # log_softmax over actions (axis=1), max-stabilized, all in f32.
    m = jnp.max(logits, axis=-1, keepdims=True)
    z = logits - m
    lse = jnp.log(jnp.sum(jnp.exp(z), axis=-1, keepdims=True))
    out_ref[...] = (z - lse).astype(out_ref.dtype)


# ---------------------------------------------------------------------------
# Wrapper
# ---------------------------------------------------------------------------
def pcn_forward(params, state, desired_return, desired_horizon, *,
                batch_tile=256):
    """JAX wrapper: one feature concat (glue) + fused Pallas kernel.

    Small batches run as a single VMEM-resident call (no grid / pipeline setup).
    Large batches (B > batch_tile and divisible by it) stream the batch axis
    through a "parallel" grid with weights kept VMEM-resident.
    """
    f32 = jnp.float32
    x = jnp.concatenate(
        [state.astype(f32),
         desired_return.astype(f32),
         desired_horizon.astype(f32)], axis=-1)        # [B, S + R + 1]

    B, F = x.shape
    H = params["w1"].shape[0]
    A = params["w2"].shape[1]

    inputs = (
        x,
        params["w_emb"], params["b_emb"],
        params["w1"], params["b1"],
        params["w2"], params["b2"],
    )
    kernel = functools.partial(_pcn_fused_kernel, hidden_dim=H)
    out_shape = jax.ShapeDtypeStruct((B, A), f32)

    use_tiled = (B > batch_tile) and (B % batch_tile == 0)

    if not use_tiled:
        # Single resident tile: no grid, no double-buffering of tiny inputs.
        vmem = pl.BlockSpec(memory_space=pltpu.MemorySpace.VMEM)
        return pl.pallas_call(
            kernel,
            out_shape=out_shape,
            in_specs=[vmem] * len(inputs),
            out_specs=vmem,
        )(*inputs)

    # Batch-tiled, weight-resident pipeline (large-B serving path).
    tb = batch_tile
    grid = (B // tb,)

    def const_spec(arr):
        return pl.BlockSpec(arr.shape, lambda i: (0,) * arr.ndim)

    in_specs = [pl.BlockSpec((tb, F), lambda i: (i, 0))] + \
               [const_spec(a) for a in inputs[1:]]
    out_spec = pl.BlockSpec((tb, A), lambda i: (i, 0))
    # TODO(synk): output last dim (A=4) forces masked stores; padding to 128 lanes
    # only matters at very large B, so it is left as-is.

    return pl.pallas_call(
        kernel,
        out_shape=out_shape,
        grid=grid,
        in_specs=in_specs,
        out_specs=out_spec,
        compiler_params=pltpu.CompilerParams(
            dimension_semantics=("parallel",)),
    )(*inputs)


# ---------------------------------------------------------------------------
# Parameters
# ---------------------------------------------------------------------------
def init_params(key, state_dim, action_dim, reward_dim, scaling_factor,
                hidden_dim=32):
    """Synthetic parameters (PyTorch Linear shapes, stored as [in, out]).

    Besides the raw per-layer weights (used by the pure-JAX reference), this
    builds the fused kernel parameters:
      w_emb = block_diag(Ws, diag(scaling_factor) @ Wc)   (S + R + 1, 2H)
      b_emb = concat(bs, bc)                              (1, 2H)
    """
    ks = jax.random.split(key, 8)
    c_dim = reward_dim + 1

    def lin(kw, kb, d_in, d_out):
        bound = 1.0 / jnp.sqrt(jnp.float32(d_in))
        w = jax.random.uniform(kw, (d_in, d_out), jnp.float32, -bound, bound)
        b = jax.random.uniform(kb, (1, d_out), jnp.float32, -bound, bound)
        return w, b

    ws, bs = lin(ks[0], ks[1], state_dim, hidden_dim)
    wc, bc = lin(ks[2], ks[3], c_dim, hidden_dim)
    w1, b1 = lin(ks[4], ks[5], hidden_dim, hidden_dim)
    w2, b2 = lin(ks[6], ks[7], hidden_dim, action_dim)

    scale = jnp.asarray(scaling_factor, jnp.float32).reshape(1, c_dim)

    # Fold scaling into Wc and build the block-diagonal embedding weight.
    wc_scaled = wc * scale.reshape(c_dim, 1)                 # diag(scale) @ Wc
    w_emb = jnp.zeros((state_dim + c_dim, 2 * hidden_dim), jnp.float32)
    w_emb = w_emb.at[:state_dim, :hidden_dim].set(ws)
    w_emb = w_emb.at[state_dim:, hidden_dim:].set(wc_scaled)
    b_emb = jnp.concatenate([bs, bc], axis=-1)               # [1, 2H]

    return {
        # raw params (reference semantics, identical to the PyTorch module)
        "scaling_factor": scale,
        "ws": ws, "bs": bs,
        "wc": wc, "bc": bc,
        "w1": w1, "b1": b1,
        "w2": w2, "b2": b2,
        # fused params consumed by the Pallas kernel
        "w_emb": w_emb, "b_emb": b_emb,
    }


def _reference_forward(params, state, desired_return, desired_horizon):
    """Pure-JAX reference matching the PyTorch module exactly."""
    c = jnp.concatenate([desired_return, desired_horizon], axis=-1)
    c = c * params["scaling_factor"]
    s = jax.nn.sigmoid(state @ params["ws"] + params["bs"])
    ce = jax.nn.sigmoid(c @ params["wc"] + params["bc"])
    h = jnp.maximum((s * ce) @ params["w1"] + params["b1"], 0.0)
    logits = h @ params["w2"] + params["b2"]
    return jax.nn.log_softmax(logits, axis=1)


# ---------------------------------------------------------------------------
# Test harness
# ---------------------------------------------------------------------------
if __name__ == "__main__":
    STATE_DIM = 16
    ACTION_DIM = 4
    REWARD_DIM = 2          # => concat dim = 3
    HIDDEN = 32
    scaling_factor = [0.1, 0.1, 0.01]

    key = jax.random.PRNGKey(0)
    kp, kx, kr, kh = jax.random.split(key, 4)
    params = init_params(kp, STATE_DIM, ACTION_DIM, REWARD_DIM,
                         scaling_factor, hidden_dim=HIDDEN)

    def make_inputs(b, k):
        k1, k2, k3 = jax.random.split(k, 3)
        st = jax.random.normal(k1, (b, STATE_DIM), jnp.float32)
        dr = jax.random.normal(k2, (b, REWARD_DIM), jnp.float32) * 10.0
        dh = jax.random.uniform(k3, (b, 1), jnp.float32, 1.0, 50.0)
        return st, dr, dh

    # --- small batch: single resident-VMEM call (no grid) -------------------
    state, dret, dhor = make_inputs(8, kx)
    out_small = jax.block_until_ready(pcn_forward(params, state, dret, dhor))
    ref_small = _reference_forward(params, state, dret, dhor)
    assert out_small.shape == (8, ACTION_DIM)
    assert jnp.allclose(out_small, ref_small, atol=3e-5, rtol=3e-5), \
        "small-batch mismatch vs reference"
    assert jnp.allclose(jnp.sum(jnp.exp(out_small), axis=1), 1.0, atol=1e-5)

    # --- large batch: batch-tiled, weight-resident, parallel grid ------------
    state_l, dret_l, dhor_l = make_inputs(1024, kr)
    out_large = jax.block_until_ready(
        pcn_forward(params, state_l, dret_l, dhor_l, batch_tile=256))
    ref_large = _reference_forward(params, state_l, dret_l, dhor_l)
    assert out_large.shape == (1024, ACTION_DIM)
    assert jnp.allclose(out_large, ref_large, atol=3e-5, rtol=3e-5), \
        "large-batch mismatch vs reference"
    assert jnp.allclose(jnp.sum(jnp.exp(out_large), axis=1), 1.0, atol=1e-5)

    print("KERNEL_OK")
</pallas_src>

<mosaic_0001>
module attributes {stable_mosaic.version = 11 : i64} {
  func.func @_pcn_fused_kernel(%arg0: memref<8x19xf32, #tpu.memory_space<vmem>>, %arg1: memref<19x64xf32, #tpu.memory_space<vmem>>, %arg2: memref<1x64xf32, #tpu.memory_space<vmem>>, %arg3: memref<32x32xf32, #tpu.memory_space<vmem>>, %arg4: memref<1x32xf32, #tpu.memory_space<vmem>>, %arg5: memref<32x4xf32, #tpu.memory_space<vmem>>, %arg6: memref<1x4xf32, #tpu.memory_space<vmem>>, %arg7: memref<8x4xf32, #tpu.memory_space<vmem>>) attributes {dimension_semantics = [], scalar_prefetch = 0 : i64, scratch_operands = 0 : i64, tpu.core_type = #tpu.core_type<tc>} {
    %c0 = arith.constant 0 : index
    %c0_0 = arith.constant 0 : index
    %0 = vector.load %arg0[%c0, %c0_0] : memref<8x19xf32, #tpu.memory_space<vmem>>, vector<8x19xf32>
    %c0_1 = arith.constant 0 : index
    %c0_2 = arith.constant 0 : index
    %1 = vector.load %arg1[%c0_1, %c0_2] : memref<19x64xf32, #tpu.memory_space<vmem>>, vector<19x64xf32>
    %cst = arith.constant dense<0.000000e+00> : vector<8x64xf32>
    %2 = tpu.matmul %0, %1, %cst {dimension_numbers = #tpu.dot_dimension_numbers<[1], [0], [0], [1], [0, 0, 1, 1], [], []>} : vector<8x19xf32>, vector<19x64xf32>, vector<8x64xf32> -> vector<8x64xf32>
    %c0_3 = arith.constant 0 : index
    %c0_4 = arith.constant 0 : index
    %3 = vector.load %arg2[%c0_3, %c0_4] : memref<1x64xf32, #tpu.memory_space<vmem>>, vector<1x64xf32>
    %4 = vector.broadcast %3 : vector<1x64xf32> to vector<8x64xf32>
    %5 = arith.addf %2, %4 : vector<8x64xf32>
    %6 = arith.negf %5 : vector<8x64xf32>
    %7 = math.exp %6 : vector<8x64xf32>
    %cst_5 = arith.constant 1.000000e+00 : f32
    %8 = vector.broadcast %cst_5 : f32 to vector<8x64xf32>
    %9 = arith.addf %8, %7 : vector<8x64xf32>
    %10 = arith.divf %8, %9 : vector<8x64xf32>
    %11 = vector.extract_strided_slice %10 {offsets = [0, 0], sizes = [8, 32], strides = [1, 1]} : vector<8x64xf32> to vector<8x32xf32>
    %12 = vector.extract_strided_slice %10 {offsets = [0, 32], sizes = [8, 32], strides = [1, 1]} : vector<8x64xf32> to vector<8x32xf32>
    %13 = arith.mulf %11, %12 : vector<8x32xf32>
    %c0_6 = arith.constant 0 : index
    %c0_7 = arith.constant 0 : index
    %14 = vector.load %arg3[%c0_6, %c0_7] : memref<32x32xf32, #tpu.memory_space<vmem>>, vector<32x32xf32>
    %cst_8 = arith.constant dense<0.000000e+00> : vector<8x32xf32>
    %15 = tpu.matmul %13, %14, %cst_8 {dimension_numbers = #tpu.dot_dimension_numbers<[1], [0], [0], [1], [0, 0, 1, 1], [], []>} : vector<8x32xf32>, vector<32x32xf32>, vector<8x32xf32> -> vector<8x32xf32>
    %c0_9 = arith.constant 0 : index
    %c0_10 = arith.constant 0 : index
    %16 = vector.load %arg4[%c0_9, %c0_10] : memref<1x32xf32, #tpu.memory_space<vmem>>, vector<1x32xf32>
    %17 = vector.broadcast %16 : vector<1x32xf32> to vector<8x32xf32>
    %18 = arith.addf %15, %17 : vector<8x32xf32>
    %cst_11 = arith.constant 0.000000e+00 : f32
    %19 = vector.broadcast %cst_11 : f32 to vector<8x32xf32>
    %20 = arith.maximumf %18, %19 : vector<8x32xf32>
    %c0_12 = arith.constant 0 : index
    %c0_13 = arith.constant 0 : index
    %21 = vector.load %arg5[%c0_12, %c0_13] : memref<32x4xf32, #tpu.memory_space<vmem>>, vector<32x4xf32>
    %cst_14 = arith.constant dense<0.000000e+00> : vector<8x4xf32>
    %22 = tpu.matmul %20, %21, %cst_14 {dimension_numbers = #tpu.dot_dimension_numbers<[1], [0], [0], [1], [0, 0, 1, 1], [], []>} : vector<8x32xf32>, vector<32x4xf32>, vector<8x4xf32> -> vector<8x4xf32>
    %c0_15 = arith.constant 0 : index
    %c0_16 = arith.constant 0 : index
    %23 = vector.load %arg6[%c0_15, %c0_16] : memref<1x4xf32, #tpu.memory_space<vmem>>, vector<1x4xf32>
    %24 = vector.broadcast %23 : vector<1x4xf32> to vector<8x4xf32>
    %25 = arith.addf %22, %24 : vector<8x4xf32>
    %cst_17 = arith.constant dense<0xFF800000> : vector<8xf32>
    %26 = vector.multi_reduction <maximumf>, %25, %cst_17 [1] : vector<8x4xf32> to vector<8xf32>
    %27 = vector.shape_cast %26 : vector<8xf32> to vector<8x1xf32>
    %28 = vector.broadcast %27 : vector<8x1xf32> to vector<8x4xf32>
    %29 = arith.subf %25, %28 : vector<8x4xf32>
    %30 = math.exp %29 : vector<8x4xf32>
    %cst_18 = arith.constant dense<0.000000e+00> : vector<8xf32>
    %31 = vector.multi_reduction <add>, %30, %cst_18 [1] : vector<8x4xf32> to vector<8xf32>
    %32 = vector.shape_cast %31 : vector<8xf32> to vector<8x1xf32>
    %33 = math.log %32 : vector<8x1xf32>
    %34 = vector.broadcast %33 : vector<8x1xf32> to vector<8x4xf32>
    %35 = arith.subf %29, %34 : vector<8x4xf32>
    %c0_19 = arith.constant 0 : index
    %c0_20 = arith.constant 0 : index
    %36 = vector.load %arg7[%c0_19, %c0_20] : memref<8x4xf32, #tpu.memory_space<vmem>>, vector<8x4xf32>
    tpu.vector_store %arg7[%c0_19, %c0_20], %35 {strides = array<i32>} : memref<8x4xf32, #tpu.memory_space<vmem>>, vector<8x4xf32>,
    return
  }
}

</mosaic_0001>

<llo_original>
// kernel: tpu_custom_call.1
$region0: #{tpu_custom_call.1}
  #allocation0 [shape = 'u32[]', space=smem, size = 0x4, offset = 0x4, fixed_abs, tag = 'smem constant byte address 0x4 - core index']
  #allocation1 [shape = 'u32[144,128]{1,0:T(1,128)}', space=vmem, size = 0x12000, scoped, tag = 'internal scratch']
  %s0 = inlined_call_operand.vmem [shape: f32[8,19], index: 0, kind: input, shape index: {}]
  %s1 = inlined_call_operand.hbm [shape: f32[19,64], index: 1, kind: input, shape index: {}]
  %s2 = inlined_call_operand.vmem [shape: f32[1,64], index: 2, kind: input, shape index: {}]
  %s3 = inlined_call_operand.vmem [shape: f32[32,32], index: 3, kind: input, shape index: {}]
  %s4 = inlined_call_operand.hbm [shape: f32[1,32], index: 4, kind: input, shape index: {}]
  %s5 = inlined_call_operand.vmem [shape: f32[32,4], index: 5, kind: input, shape index: {}]
  %s6 = inlined_call_operand.vmem [shape: f32[1,4], index: 6, kind: input, shape index: {}]
  %s7 = inlined_call_operand.vmem [shape: f32[8,4], index: 7, kind: output, shape index: {}]
  %s8 = sld [smem:[#allocation0]]
  $region46: #{tpu_custom_call.1} parent=0
    _
  %s10 = ssub.s32 1, %s8
  %s11 = scalar_select 0, %s10, %s8
  $region1: #{tpu_custom_call.1} parent=0
    #allocation2 [shape = 'u8[12288]{0}', space=vmem, size = 0x3000, scoped, tag = 'input window, operand 1, single buffered']
    #allocation3 [shape = 's32[1]{0}', space=sflag, size = 0x4, scoped, tag = 'scoped memory for tpu_custom_call.1']
    #allocation4 [shape = 'u8[512]{0}', space=vmem, size = 0x400, scoped, tag = 'input window, operand 4, single buffered']
    #allocation5 [shape = 's32[1]{0}', space=sflag, size = 0x4, scoped, tag = 'scoped memory for tpu_custom_call.1']
    %12 = vsyncpa [#allocation3], 0
    %13 = vsyncpa [#allocation5], 0
    // Predicated region
    $region2: #{tpu_custom_call.1} parent=1 // pred_check
      _
    $region3: #{tpu_custom_call.1} parent=1 // pred_check_branch
      %15 = sbr.rel (0) target = $region5
    $region4: #{tpu_custom_call.1} parent=1 // pred_region
      _
    $region5: #{tpu_custom_call.1} parent=1 // pred_fallthru
      _
    // Predicated region
    $region6: #{tpu_custom_call.1} parent=1 // pred_check
      _
    $region7: #{tpu_custom_call.1} parent=1 // pred_check_branch
      %17 = sbr.rel (0) target = $region9
    $region8: #{tpu_custom_call.1} parent=1 // pred_region
      %s19 = ssub.s32 384, 384
      %20 = vsyncadd [#allocation3], %s19
      %s21 = sshll.u32 [#allocation2], 4
      %s22 = int_to_ptr.vmem [resolvable:$true] %s21
      %27 = dma.hbm_to_vmem [thread:$0]  %s1, 384, %s22, [#allocation3], 128, 128, 8
    $region9: #{tpu_custom_call.1} parent=1 // pred_fallthru
      _
    // Predicated region
    $region10: #{tpu_custom_call.1} parent=1 // pred_check
      _
    $region11: #{tpu_custom_call.1} parent=1 // pred_check_branch
      %29 = sbr.rel (0) target = $region13
    $region12: #{tpu_custom_call.1} parent=1 // pred_region
      _
    $region13: #{tpu_custom_call.1} parent=1 // pred_fallthru
      _
    // Predicated region
    $region14: #{tpu_custom_call.1} parent=1 // pred_check
      _
    $region15: #{tpu_custom_call.1} parent=1 // pred_check_branch
      %31 = sbr.rel (0) target = $region17
    $region16: #{tpu_custom_call.1} parent=1 // pred_region
      _
    $region17: #{tpu_custom_call.1} parent=1 // pred_fallthru
      _
    // Predicated region
    $region18: #{tpu_custom_call.1} parent=1 // pred_check
      _
    $region19: #{tpu_custom_call.1} parent=1 // pred_check_branch
      %33 = sbr.rel (0) target = $region21
    $region20: #{tpu_custom_call.1} parent=1 // pred_region
      %s35 = ssub.s32 16, 16
      %36 = vsyncadd [#allocation5], %s35
      %s38 = sshll.u32 [#allocation4], 4
      %s39 = int_to_ptr.vmem [resolvable:$true] %s38
      %41 = dma.hbm_to_vmem [thread:$0]  %s4, 16, %s39, [#allocation5]
    $region21: #{tpu_custom_call.1} parent=1 // pred_fallthru
      _
    // Predicated region
    $region22: #{tpu_custom_call.1} parent=1 // pred_check
      _
    $region23: #{tpu_custom_call.1} parent=1 // pred_check_branch
      %43 = sbr.rel (0) target = $region25
    $region24: #{tpu_custom_call.1} parent=1 // pred_region
      _
    $region25: #{tpu_custom_call.1} parent=1 // pred_fallthru
      _
    // Predicated region
    $region26: #{tpu_custom_call.1} parent=1 // pred_check
      _
    $region27: #{tpu_custom_call.1} parent=1 // pred_check_branch
      %45 = sbr.rel (0) target = $region29
    $region28: #{tpu_custom_call.1} parent=1 // pred_region
      _
    $region29: #{tpu_custom_call.1} parent=1 // pred_fallthru
      _
    // Predicated region
    $region30: #{tpu_custom_call.1} parent=1 // pred_check
      _
    $region31: #{tpu_custom_call.1} parent=1 // pred_check_branch
      %47 = sbr.rel (0) target = $region33
    $region32: #{tpu_custom_call.1} parent=1 // pred_region
      %48 = dma.done [#allocation3], 384
    $region33: #{tpu_custom_call.1} parent=1 // pred_fallthru
      _
    // Predicated region
    $region34: #{tpu_custom_call.1} parent=1 // pred_check
      _
    $region35: #{tpu_custom_call.1} parent=1 // pred_check_branch
      %50 = sbr.rel (0) target = $region37
    $region36: #{tpu_custom_call.1} parent=1 // pred_region
      %51 = dma.done [#allocation5], 16
    $region37: #{tpu_custom_call.1} parent=1 // pred_fallthru
      _
    %v52 = vld [vmem:[%s0] sm:$0xff]
    %v53 = vld [vmem:[#allocation2] sm:$0xff]
    %v54 = vld [vmem:[#allocation2 + $0x8] sm:$0xff]
    %v55 = vld [vmem:[#allocation2 + $0x10] sm:$0x7]
    %v56 = vld [vmem:[%s2] sm:$0x1]
    %v58 = vlaneseq
    %v59 = vshrl.u32 %v58, 7
    %v60 = vsub.s32 0, %v59
    %v61 = vrot.slane %v56, %v60
    %vm63 = vcmask 154624
    %v65 = vsel %vm63, %v52, 0
    %vm67 = vcmask 1042432
    %v69 = vsel %vm67, %v55, 0
    %71 = vmatprep.subr.mxu0 0.0
    %72 = vmatpush1.msra.mxu0 0.0
    %73 = vmatprep.subr.mxu0 0.0
    %74 = vmatpush1.msra.mxu0 0.0
    %75 = vmatprep.subr.mxu0 0.0
    %76 = vmatpush1.msra.mxu0 0.0
    %77 = vmatprep.subr.mxu0 0.0
    %78 = vmatpush1.msra.mxu0 0.0
    %79 = vmatprep.subr.mxu0 0.0
    %80 = vmatpush1.msra.mxu0 0.0
    %81 = vmatprep.subr.mxu0 0.0
    %82 = vmatpush1.msra.mxu0 0.0
    %83 = vmatprep.subr.mxu0 0.0
    %84 = vmatpush1.msra.mxu0 0.0
    %85 = vmatprep.subr.mxu0 0.0
    %86 = vmatpush1.msra.mxu0 0.0
    %87 = vmatprep.subr.mxu0 0.0
    %88 = vmatpush1.msra.mxu0 0.0
    %89 = vmatprep.subr.mxu0 0.0
    %90 = vmatpush1.msra.mxu0 0.0
    %91 = vmatprep.subr.mxu0 0.0
    %92 = vmatpush1.msra.mxu0 0.0
    %93 = vmatprep.subr.mxu0 0.0
    %94 = vmatpush1.msra.mxu0 0.0
    %95 = vmatprep.subr.mxu0 0.0
    %96 = vmatpush1.msra.mxu0 0.0
    %97 = vmatprep.subr.mxu0 0.0
    %98 = vmatpush1.msra.mxu0 %v69
    %99 = vmatprep.subr.mxu0 0.0
    %100 = vmatpush1.msra.mxu0 %v54
    %101 = vmatprep.subr.mxu0 0.0
    %102 = vmatpush1.msra.mxu0 %v53
    %103 = vmatprep.subr.mxu0 0.0
    %104 = vmatpush2.msra.mxu0 0.0
    %105 = vmatprep.subr.mxu0 0.0
    %106 = vmatpush2.msra.mxu0 0.0
    %107 = vmatprep.subr.mxu0 0.0
    %108 = vmatpush2.msra.mxu0 0.0
    %109 = vmatprep.subr.mxu0 0.0
    %110 = vmatpush2.msra.mxu0 0.0
    %111 = vmatprep.subr.mxu0 0.0
    %112 = vmatpush2.msra.mxu0 0.0
    %113 = vmatprep.subr.mxu0 0.0
    %114 = vmatpush2.msra.mxu0 0.0
    %115 = vmatprep.subr.mxu0 0.0
    %116 = vmatpush2.msra.mxu0 0.0
    %117 = vmatprep.subr.mxu0 0.0
    %118 = vmatpush2.msra.mxu0 0.0
    %119 = vmatprep.subr.mxu0 0.0
    %120 = vmatpush2.msra.mxu0 0.0
    %121 = vmatprep.subr.mxu0 0.0
    %122 = vmatpush2.msra.mxu0 0.0
    %123 = vmatprep.subr.mxu0 0.0
    %124 = vmatpush2.msra.mxu0 0.0
    %125 = vmatprep.subr.mxu0 0.0
    %126 = vmatpush2.msra.mxu0 0.0
    %127 = vmatprep.subr.mxu0 0.0
    %128 = vmatpush2.msra.mxu0 0.0
    %129 = vmatprep.subr.mxu0 0.0
    %130 = vmatpush2.msra.mxu0 0.0
    %131 = vmatprep.subr.mxu0 0.0
    %132 = vmatpush2.msra.mxu0 0.0
    %133 = vmatprep.subr.mxu0 0.0
    %134 = vmatpush2.msra.mxu0 0.0
    %135 = vmatprep.mubr.f32.mxu0 0.0
    %136 = vmatmul.mubr.f32.gmra.mxu0 %v65
    %v137 = vpop.f32.mrf.mxu0
    %v138 = vadd.f32 %v61, %v137
    %v139 = vpop.f32.mrf.mxu0
    %140 = vdwg.mxu0
    %v141 = vxor.u32 %v138, 2147483648
    %v142 = vmul.f32 %v141, 1.442695
    %v143 = vpow.pop %v142
    %v144 = vadd.f32 %v143, 1.0
    %v145 = vrcp.pop %v144
    %v146 = vmul.f32 1.0, %v145
    %148 = vrot.lane.b32.xlu0 %v146, 96
    %v149 = vpop.permute.xlu0 %148
    %v151 = vmul.f32 %v146, %v149
    %v152 = vld [vmem:[%s3] sm:$0xff]
    %v153 = vld [vmem:[%s3 + $0x8] sm:$0xff]
    %v154 = vld [vmem:[%s3 + $0x10] sm:$0xff]
    %v155 = vld [vmem:[%s3 + $0x18] sm:$0xff]
    %v156 = vld [vmem:[#allocation4] sm:$0x1]
    %v158 = vlaneseq
    %v159 = vshrl.u32 %v158, 7
    %v160 = vsub.s32 0, %v159
    %v161 = vrot.slane %v156, %v160
    %vm163 = vcmask 261120
    %v165 = vsel %vm163, %v151, 0
    %167 = vmatprep.subr.mxu0 0.0
    %168 = vmatpush1.msra.mxu0 0.0
    %169 = vmatprep.subr.mxu0 0.0
    %170 = vmatpush1.msra.mxu0 0.0
    %171 = vmatprep.subr.mxu0 0.0
    %172 = vmatpush1.msra.mxu0 0.0
    %173 = vmatprep.subr.mxu0 0.0
    %174 = vmatpush1.msra.mxu0 0.0
    %175 = vmatprep.subr.mxu0 0.0
    %176 = vmatpush1.msra.mxu0 0.0
    %177 = vmatprep.subr.mxu0 0.0
    %178 = vmatpush1.msra.mxu0 0.0
    %179 = vmatprep.subr.mxu0 0.0
    %180 = vmatpush1.msra.mxu0 0.0
    %181 = vmatprep.subr.mxu0 0.0
    %182 = vmatpush1.msra.mxu0 0.0
    %183 = vmatprep.subr.mxu0 0.0
    %184 = vmatpush1.msra.mxu0 0.0
    %185 = vmatprep.subr.mxu0 0.0
    %186 = vmatpush1.msra.mxu0 0.0
    %187 = vmatprep.subr.mxu0 0.0
    %188 = vmatpush1.msra.mxu0 0.0
    %189 = vmatprep.subr.mxu0 0.0
    %190 = vmatpush1.msra.mxu0 0.0
    %191 = vmatprep.subr.mxu0 0.0
    %192 = vmatpush1.msra.mxu0 %v155
    %193 = vmatprep.subr.mxu0 0.0
    %194 = vmatpush1.msra.mxu0 %v154
    %195 = vmatprep.subr.mxu0 0.0
    %196 = vmatpush1.msra.mxu0 %v153
    %197 = vmatprep.subr.mxu0 0.0
    %198 = vmatpush1.msra.mxu0 %v152
    %199 = vmatprep.subr.mxu0 0.0
    %200 = vmatpush2.msra.mxu0 0.0
    %201 = vmatprep.subr.mxu0 0.0
    %202 = vmatpush2.msra.mxu0 0.0
    %203 = vmatprep.subr.mxu0 0.0
    %204 = vmatpush2.msra.mxu0 0.0
    %205 = vmatprep.subr.mxu0 0.0
    %206 = vmatpush2.msra.mxu0 0.0
    %207 = vmatprep.subr.mxu0 0.0
    %208 = vmatpush2.msra.mxu0 0.0
    %209 = vmatprep.subr.mxu0 0.0
    %210 = vmatpush2.msra.mxu0 0.0
    %211 = vmatprep.subr.mxu0 0.0
    %212 = vmatpush2.msra.mxu0 0.0
    %213 = vmatprep.subr.mxu0 0.0
    %214 = vmatpush2.msra.mxu0 0.0
    %215 = vmatprep.subr.mxu0 0.0
    %216 = vmatpush2.msra.mxu0 0.0
    %217 = vmatprep.subr.mxu0 0.0
    %218 = vmatpush2.msra.mxu0 0.0
    %219 = vmatprep.subr.mxu0 0.0
    %220 = vmatpush2.msra.mxu0 0.0
    %221 = vmatprep.subr.mxu0 0.0
    %222 = vmatpush2.msra.mxu0 0.0
    %223 = vmatprep.subr.mxu0 0.0
    %224 = vmatpush2.msra.mxu0 0.0
    %225 = vmatprep.subr.mxu0 0.0
    %226 = vmatpush2.msra.mxu0 0.0
    %227 = vmatprep.subr.mxu0 0.0
    %228 = vmatpush2.msra.mxu0 0.0
    %229 = vmatprep.subr.mxu0 0.0
    %230 = vmatpush2.msra.mxu0 0.0
    %231 = vmatprep.mubr.f32.mxu0 0.0
    %232 = vmatmul.mubr.f32.gmra.mxu0 %v165
    %v233 = vpop.f32.mrf.mxu0
    %v234 = vadd.f32 %v161, %v233
    %v235 = vpop.f32.mrf.mxu0
    %236 = vdwg.mxu0
    %v237 = vmax.f32 %v234, 0.0
    %v238 = vld [vmem:[%s5] sm:$0xff]
    %v239 = vld [vmem:[%s5 + $0x8] sm:$0xff]
    %v240 = vld [vmem:[%s5 + $0x10] sm:$0xff]
    %v241 = vld [vmem:[%s5 + $0x18] sm:$0xff]
    %v242 = vld [vmem:[%s6] sm:$0x1]
    %v244 = vlaneseq
    %v245 = vshrl.u32 %v244, 7
    %v246 = vsub.s32 0, %v245
    %v247 = vrot.slane %v242, %v246
    %v250 = vsel %vm163, %v237, 0
    %252 = vmatprep.subr.mxu0 0.0
    %253 = vmatpush1.msra.mxu0 0.0
    %254 = vmatprep.subr.mxu0 0.0
    %255 = vmatpush1.msra.mxu0 0.0
    %256 = vmatprep.subr.mxu0 0.0
    %257 = vmatpush1.msra.mxu0 0.0
    %258 = vmatprep.subr.mxu0 0.0
    %259 = vmatpush1.msra.mxu0 0.0
    %260 = vmatprep.subr.mxu0 0.0
    %261 = vmatpush1.msra.mxu0 0.0
    %262 = vmatprep.subr.mxu0 0.0
    %263 = vmatpush1.msra.mxu0 0.0
    %264 = vmatprep.subr.mxu0 0.0
    %265 = vmatpush1.msra.mxu0 0.0
    %266 = vmatprep.subr.mxu0 0.0
    %267 = vmatpush1.msra.mxu0 0.0
    %268 = vmatprep.subr.mxu0 0.0
    %269 = vmatpush1.msra.mxu0 0.0
    %270 = vmatprep.subr.mxu0 0.0
    %271 = vmatpush1.msra.mxu0 0.0
    %272 = vmatprep.subr.mxu0 0.0
    %273 = vmatpush1.msra.mxu0 0.0
    %274 = vmatprep.subr.mxu0 0.0
    %275 = vmatpush1.msra.mxu0 0.0
    %276 = vmatprep.subr.mxu0 0.0
    %277 = vmatpush1.msra.mxu0 %v241
    %278 = vmatprep.subr.mxu0 0.0
    %279 = vmatpush1.msra.mxu0 %v240
    %280 = vmatprep.subr.mxu0 0.0
    %281 = vmatpush1.msra.mxu0 %v239
    %282 = vmatprep.subr.mxu0 0.0
    %283 = vmatpush1.msra.mxu0 %v238
    %284 = vmatprep.subr.mxu0 0.0
    %285 = vmatpush2.msra.mxu0 0.0
    %286 = vmatprep.subr.mxu0 0.0
    %287 = vmatpush2.msra.mxu0 0.0
    %288 = vmatprep.subr.mxu0 0.0
    %289 = vmatpush2.msra.mxu0 0.0
    %290 = vmatprep.subr.mxu0 0.0
    %291 = vmatpush2.msra.mxu0 0.0
    %292 = vmatprep.subr.mxu0 0.0
    %293 = vmatpush2.msra.mxu0 0.0
    %294 = vmatprep.subr.mxu0 0.0
    %295 = vmatpush2.msra.mxu0 0.0
    %296 = vmatprep.subr.mxu0 0.0
    %297 = vmatpush2.msra.mxu0 0.0
    %298 = vmatprep.subr.mxu0 0.0
    %299 = vmatpush2.msra.mxu0 0.0
    %300 = vmatprep.subr.mxu0 0.0
    %301 = vmatpush2.msra.mxu0 0.0
    %302 = vmatprep.subr.mxu0 0.0
    %303 = vmatpush2.msra.mxu0 0.0
    %304 = vmatprep.subr.mxu0 0.0
    %305 = vmatpush2.msra.mxu0 0.0
    %306 = vmatprep.subr.mxu0 0.0
    %307 = vmatpush2.msra.mxu0 0.0
    %308 = vmatprep.subr.mxu0 0.0
    %309 = vmatpush2.msra.mxu0 0.0
    %310 = vmatprep.subr.mxu0 0.0
    %311 = vmatpush2.msra.mxu0 0.0
    %312 = vmatprep.subr.mxu0 0.0
    %313 = vmatpush2.msra.mxu0 0.0
    %314 = vmatprep.subr.mxu0 0.0
    %315 = vmatpush2.msra.mxu0 0.0
    %316 = vmatprep.mubr.f32.mxu0 0.0
    %317 = vmatmul.mubr.f32.gmra.mxu0 %v250
    %v318 = vpop.f32.mrf.mxu0
    %v319 = vadd.f32 %v247, %v318
    %v320 = vpop.f32.mrf.mxu0
    %321 = vdwg.mxu0
    %vm322 = vcmask 31744
    %v323 = vsel %vm322, %v319, -inf
    %324 = vmax.xlane.f32.xlu0 %v323
    %v325 = vpop.xlane.xlu0 %324
    %v326 = vsub.f32 %v319, %v325
    %v327 = vmul.f32 %v326, 1.442695
    %v328 = vpow.pop %v327
    %v329 = vsel %vm322, %v328, 0.0
    %330 = vadd.xlane.f32.xlu0 %v329
    %v331 = vpop.xlane.xlu0 %330
    %v332 = vlog2.pop %v331
    %v333 = vmul.f32 %v332, 0.6931472
    %v334 = vsub.f32 %v326, %v333
    %335 = vst.msk [vmem:[%s7] sm:$0xff] %vm322, %v334
    // Predicated region
    $region38: #{tpu_custom_call.1} parent=1 // pred_check
      _
    $region39: #{tpu_custom_call.1} parent=1 // pred_check_branch
      %337 = sbr.rel (0) target = $region41
    $region40: #{tpu_custom_call.1} parent=1 // pred_region
      _
    $region41: #{tpu_custom_call.1} parent=1 // pred_fallthru
      _
    // Predicated region
    $region42: #{tpu_custom_call.1} parent=1 // pred_check
      _
    $region43: #{tpu_custom_call.1} parent=1 // pred_check_branch
      %339 = sbr.rel (0) target = $region45
    $region44: #{tpu_custom_call.1} parent=1 // pred_region
      _
    $region45: #{tpu_custom_call.1} parent=1 // pred_fallthru
      _
    %340 = vsyncpa [#allocation3], 1
    %341 = vsyncpa [#allocation5], 1

</llo_original>
